<compile_context>
chip_gen: v7x
topology: tpu7x:2x2x1
jax: 0.10.0
libtpu: 0.0.40
codegen_flags: <defaults>
</compile_context>

<pallas_src>
import math

import jax
import jax.numpy as jnp
from jax import lax
from jax.experimental import pallas as pl
from jax.experimental.pallas import tpu as pltpu

_MIB = 1024 * 1024


def _tile_budget_bytes():
    """Per-generation streamed-tile byte budget (Pallas double-buffers it)."""
    try:
        vmem_cap = pltpu.get_tpu_info().vmem_capacity_bytes
    except Exception:  # conservative fallback if the query is unavailable
        vmem_cap = 64 * _MIB
    # v7x: 64 MiB VMEM per TC  -> 8 MiB tiles (16 MiB double-buffered).
    # v5e/v6e: 128 MiB VMEM    -> 16 MiB tiles.
    return 8 * _MIB if vmem_cap <= 64 * _MIB else 16 * _MIB


def _pick_tn(n):
    """Largest divisor of n that is <= 8 and keeps >= 2 batch grid steps,
    so the 'parallel' batch axis can shard across v7x's two TensorCores."""
    if n <= 1:
        return 1
    best = 1
    for t in range(1, min(8, n // 2) + 1):
        if n % t == 0:
            best = t
    return best


def _pick_tiling(hw, tn, c, itemsize, budget_bytes):
    """Return (thw, hw_pad): thw divides hw_pad, hw_pad >= hw (zero padded)."""
    per_lane = tn * c * itemsize
    cap_lanes = max(128, (budget_bytes // per_lane) // 128 * 128)
    if hw % 128 == 0:
        if hw <= cap_lanes:
            return hw, hw
        t = cap_lanes
        while t >= 128:               # 128 always divides hw here -> terminates
            if hw % t == 0:
                return t, hw
            t -= 128
        return 128, hw
    # HW not 128-aligned. If small enough, take it in one full-width step
    # (the f32 accumulator mirrors the tile, so budget against itemsize + 4).
    cap_single = max(1, budget_bytes // (tn * c * (itemsize + 4)))
    if hw <= cap_single:
        return hw, hw
    # Large & misaligned: stream lane-dense tiles over a zero-padded spatial dim.
    thw = cap_lanes
    hw_pad = int(math.ceil(hw / thw)) * thw
    return thw, hw_pad


def _make_kernel(hw_true, thw, acc_w, unroll):
    inv_hw = 1.0 / float(hw_true)
    n_inner = thw // acc_w

    def kernel(x_ref, w1_ref, w2_ref, o_ref, acc_ref):
        # x_ref:  (TN, C, THW)   streamed spatial tile
        # w1_ref: (C, hidden)    pre-transposed fc1 weight (resident)
        # w2_ref: (hidden, C)    pre-transposed fc2 weight (resident)
        # o_ref:  (OUT_ROWS, C)  OUT_ROWS = TN rounded up to a multiple of 8
        # acc_ref:(TN, C, ACC_W) f32 running partial sum
        tn = x_ref.shape[0]
        k = pl.program_id(1)

        @pl.when(k == 0)
        def _init():
            acc_ref[...] = jnp.zeros_like(acc_ref)

        if n_inner == 1:
            acc_ref[...] += x_ref[...].astype(jnp.float32)
        else:
            def body(j, carry):
                base = pl.multiple_of(j * acc_w, acc_w)
                acc_ref[...] += x_ref[:, :, pl.ds(base, acc_w)].astype(jnp.float32)
                return carry
            lax.fori_loop(0, n_inner, body, 0, unroll=unroll)

        @pl.when(k == pl.num_programs(1) - 1)
        def _finalize():
            avg = jnp.sum(acc_ref[...], axis=-1) * inv_hw                   # (TN, C)
            h = jnp.dot(avg, w1_ref[...], preferred_element_type=jnp.float32)
            h = jnp.maximum(h, 0.0)                                         # ReLU
            out = jnp.dot(h, w2_ref[...], preferred_element_type=jnp.float32)
            o_ref[0:tn, :] = jax.nn.sigmoid(out).astype(o_ref.dtype)        # Sigmoid

    return kernel


def channel_attention(x, w1, w2, *, tn=None, max_tile_bytes=None):
    """x: (N, C, H, W); w1: (C//r, C); w2: (C, C//r). Returns (N, C, 1, 1) like PyTorch."""
    N, C, H, W = x.shape
    hidden = w1.shape[0]
    HW = H * W
    x_flat = x.reshape(N, C, HW)

    # Pre-transposed, contraction-friendly weight layouts (no in-kernel transpose).
    # NOTE: weights are kept in float32 for a float32 MXU accumulate.
    w1_t = jnp.asarray(w1).T.astype(jnp.float32)   # (C, hidden)
    w2_t = jnp.asarray(w2).T.astype(jnp.float32)   # (hidden, C)

    if tn is None:
        tn = _pick_tn(N)
    assert N % tn == 0
    grid0 = N // tn

    budget = max_tile_bytes if max_tile_bytes is not None else _tile_budget_bytes()
    itemsize = x_flat.dtype.itemsize
    thw, hw_pad = _pick_tiling(HW, tn, C, itemsize, budget)
    if hw_pad != HW:
        # Zero padding does not change the spatial sum; scaling uses the true 1/HW.
        x_flat = jnp.pad(x_flat, ((0, 0), (0, 0), (0, hw_pad - HW)))

    # Accumulator lane width: wide enough to break the serial add chain and amortize
    # loop overhead, small enough to keep the VMEM accumulator modest.
    if thw % 128 == 0:
        acc_w = 128
        for w in (1024, 512, 256, 128):
            if thw % w == 0 and tn * C * w * 4 <= 2 * _MIB:
                acc_w = w
                break
    else:
        acc_w = thw
    n_inner = thw // acc_w
    unroll = min(8, n_inner) if n_inner > 1 else 1

    grid = (grid0, hw_pad // thw)

    # Output rows padded to a multiple of 8 so the out block is always layout-legal.
    out_rows = ((tn + 7) // 8) * 8

    # VMEM budget: 2x double-buffered x tile + f32 accumulator + resident weights +
    # output block + headroom for compiler scratch.
    x_tile_bytes = tn * C * thw * itemsize
    acc_bytes = tn * C * acc_w * 4
    w_bytes = 2 * (C * hidden + hidden * C) * 4
    out_bytes = 2 * out_rows * C * x.dtype.itemsize
    vmem_limit = int(max(2 * x_tile_bytes + acc_bytes + w_bytes + out_bytes + 4 * _MIB,
                         32 * _MIB))

    cost = pl.CostEstimate(
        flops=int(N * C * HW + 4 * N * C * hidden),
        transcendentals=int(N * C),
        bytes_accessed=int(N * C * hw_pad * itemsize
                           + w1_t.size * 4 + w2_t.size * 4
                           + grid0 * out_rows * C * x.dtype.itemsize),
    )

    out_padded = pl.pallas_call(
        _make_kernel(HW, thw, acc_w, unroll),
        out_shape=jax.ShapeDtypeStruct((grid0 * out_rows, C), x.dtype),
        grid_spec=pltpu.PrefetchScalarGridSpec(
            num_scalar_prefetch=0,
            grid=grid,
            in_specs=[
                pl.BlockSpec((tn, C, thw), lambda i, k: (i, 0, k)),
                pl.BlockSpec((C, hidden), lambda i, k: (0, 0)),
                pl.BlockSpec((hidden, C), lambda i, k: (0, 0)),
            ],
            out_specs=pl.BlockSpec((out_rows, C), lambda i, k: (i, 0)),
            scratch_shapes=[pltpu.VMEM((tn, C, acc_w), jnp.float32)],
        ),
        compiler_params=pltpu.CompilerParams(
            dimension_semantics=("parallel", "arbitrary"),
            vmem_limit_bytes=vmem_limit,
        ),
        cost_estimate=cost,
    )(x_flat, w1_t, w2_t)

    # Drop the row padding and restore the PyTorch (N, C, 1, 1) shape.
    out = out_padded.reshape(grid0, out_rows, C)[:, :tn, :].reshape(N, C)
    return out.reshape(N, C, 1, 1)


def channel_attention_ref(x, w1, w2):
    avg = jnp.mean(x, axis=(2, 3))                 # (N, C)
    h = jnp.maximum(avg @ w1.T, 0.0)               # (N, C//r)
    out = jax.nn.sigmoid(h @ w2.T)                 # (N, C)
    return out.reshape(x.shape[0], x.shape[1], 1, 1)


if __name__ == "__main__":
    key = jax.random.PRNGKey(0)

    # Case 1: small shapes consistent with the module (in_planes=16, ratio=8 -> hidden=2).
    N, C, H, W = 2, 16, 16, 16
    hidden = C // 8
    kx, k1, k2, key = jax.random.split(key, 4)
    x = jax.random.normal(kx, (N, C, H, W), dtype=jnp.float32)
    w1 = jax.random.normal(k1, (hidden, C), dtype=jnp.float32) * 0.1
    w2 = jax.random.normal(k2, (C, hidden), dtype=jnp.float32) * 0.1

    out = jax.block_until_ready(channel_attention(x, w1, w2))
    assert out.shape == (N, C, 1, 1)
    assert jnp.allclose(out, channel_attention_ref(x, w1, w2), atol=1e-5, rtol=1e-5)

    # Case 2: bigger spatial extent, default (single-tile) path.
    N2, C2, H2, W2 = 4, 32, 64, 64
    hidden2 = C2 // 8
    kx, k1, k2, key = jax.random.split(key, 4)
    x2 = jax.random.normal(kx, (N2, C2, H2, W2), dtype=jnp.float32)
    w1b = jax.random.normal(k1, (hidden2, C2), dtype=jnp.float32) * 0.1
    w2b = jax.random.normal(k2, (C2, hidden2), dtype=jnp.float32) * 0.1

    out2 = jax.block_until_ready(channel_attention(x2, w1b, w2b))
    assert out2.shape == (N2, C2, 1, 1)
    ref2 = channel_attention_ref(x2, w1b, w2b)
    assert jnp.allclose(out2, ref2, atol=1e-5, rtol=1e-5)

    # Case 3: force a small tile budget so the multi-step HW streaming + fori fold run.
    out3 = jax.block_until_ready(
        channel_attention(x2, w1b, w2b, max_tile_bytes=512 * 1024))
    assert jnp.allclose(out3, ref2, atol=1e-5, rtol=1e-5)

    # Case 4: HW not divisible by 128 and larger than the (forced-small) tile budget:
    # exercises the zero-padded streaming path with true 1/HW scaling.
    N4, C4, H4, W4 = 2, 16, 20, 20
    kx, k1, k2, key = jax.random.split(key, 4)
    x4 = jax.random.normal(kx, (N4, C4, H4, W4), dtype=jnp.float32)
    w1c = jax.random.normal(k1, (C4 // 8, C4), dtype=jnp.float32) * 0.1
    w2c = jax.random.normal(k2, (C4, C4 // 8), dtype=jnp.float32) * 0.1
    out4 = jax.block_until_ready(
        channel_attention(x4, w1c, w2c, max_tile_bytes=16 * 1024))
    assert jnp.allclose(out4, channel_attention_ref(x4, w1c, w2c), atol=1e-5, rtol=1e-5)

    # Case 5: tiny misaligned HW, single full-width tile path.
    x5 = jax.random.normal(key, (2, 16, 6, 6), dtype=jnp.float32)
    out5 = jax.block_until_ready(channel_attention(x5, w1, w2))
    assert jnp.allclose(out5, channel_attention_ref(x5, w1, w2), atol=1e-5, rtol=1e-5)

    print("KERNEL_OK")
</pallas_src>

<mosaic_0001>
module attributes {stable_mosaic.version = 11 : i64} {
  func.func @kernel(%arg0: i32, %arg1: i32, %arg2: memref<1x16x256xf32, #tpu.memory_space<vmem>>, %arg3: memref<16x2xf32, #tpu.memory_space<vmem>>, %arg4: memref<2x16xf32, #tpu.memory_space<vmem>>, %arg5: memref<8x16xf32, #tpu.memory_space<vmem>>, %arg6: memref<1x16x256xf32, #tpu.memory_space<vmem>>) attributes {dimension_semantics = [#tpu.dimension_semantics<parallel>, #tpu.dimension_semantics<arbitrary>], iteration_bounds = array<i64: 2, 1>, scalar_prefetch = 0 : i64, scratch_operands = 1 : i64, tpu.core_type = #tpu.core_type<tc>, window_params = [{transform_indices = @transform_0, window_bounds = array<i64: 1, 16, 256>}, {pipeline_mode = #tpu.pipeline_mode<synchronous>, transform_indices = @transform_1, window_bounds = array<i64: 16, 2>}, {pipeline_mode = #tpu.pipeline_mode<synchronous>, transform_indices = @transform_2, window_bounds = array<i64: 2, 16>}, {transform_indices = @transform_3, window_bounds = array<i64: 8, 16>}]} {
    %c0_i32 = arith.constant 0 : i32
    %0 = arith.cmpi eq, %arg1, %c0_i32 : i32
    %1 = arith.extui %0 : i1 to i32
    %c0_i32_0 = arith.constant 0 : i32
    %2 = arith.cmpi ne, %1, %c0_i32_0 : i32
    scf.if %2 {
      %cst = arith.constant 0.000000e+00 : f32
      %10 = vector.broadcast %cst : f32 to vector<1x16x256xf32>
      %c0_11 = arith.constant 0 : index
      %c0_12 = arith.constant 0 : index
      %c0_13 = arith.constant 0 : index
      %11 = vector.load %arg6[%c0_11, %c0_12, %c0_13] : memref<1x16x256xf32, #tpu.memory_space<vmem>>, vector<1x16x256xf32>
      tpu.vector_store %arg6[%c0_11, %c0_12, %c0_13], %10 {strides = array<i32>} : memref<1x16x256xf32, #tpu.memory_space<vmem>>, vector<1x16x256xf32>,
    } else {
    }
    %c0 = arith.constant 0 : index
    %c0_1 = arith.constant 0 : index
    %c0_2 = arith.constant 0 : index
    %3 = vector.load %arg6[%c0, %c0_1, %c0_2] : memref<1x16x256xf32, #tpu.memory_space<vmem>>, vector<1x16x256xf32>
    %c0_3 = arith.constant 0 : index
    %c0_4 = arith.constant 0 : index
    %c0_5 = arith.constant 0 : index
    %4 = vector.load %arg2[%c0_3, %c0_4, %c0_5] : memref<1x16x256xf32, #tpu.memory_space<vmem>>, vector<1x16x256xf32>
    %5 = arith.addf %3, %4 : vector<1x16x256xf32>
    %c0_6 = arith.constant 0 : index
    %c0_7 = arith.constant 0 : index
    %c0_8 = arith.constant 0 : index
    %6 = vector.load %arg6[%c0_6, %c0_7, %c0_8] : memref<1x16x256xf32, #tpu.memory_space<vmem>>, vector<1x16x256xf32>
    tpu.vector_store %arg6[%c0_6, %c0_7, %c0_8], %5 {strides = array<i32>} : memref<1x16x256xf32, #tpu.memory_space<vmem>>, vector<1x16x256xf32>,
    %c0_i32_9 = arith.constant 0 : i32
    %7 = arith.cmpi eq, %arg1, %c0_i32_9 : i32
    %8 = arith.extui %7 : i1 to i32
    %c0_i32_10 = arith.constant 0 : i32
    %9 = arith.cmpi ne, %8, %c0_i32_10 : i32
    scf.if %9 {
      %c0_11 = arith.constant 0 : index
      %c0_12 = arith.constant 0 : index
      %c0_13 = arith.constant 0 : index
      %10 = vector.load %arg6[%c0_11, %c0_12, %c0_13] : memref<1x16x256xf32, #tpu.memory_space<vmem>>, vector<1x16x256xf32>
      %cst = arith.constant dense<0.000000e+00> : vector<1x16xf32>
      %11 = vector.multi_reduction <add>, %10, %cst [2] : vector<1x16x256xf32> to vector<1x16xf32>
      %cst_14 = arith.constant 3.906250e-03 : f32
      %12 = vector.broadcast %cst_14 : f32 to vector<1x16xf32>
      %13 = arith.mulf %11, %12 : vector<1x16xf32>
      %c0_15 = arith.constant 0 : index
      %c0_16 = arith.constant 0 : index
      %14 = vector.load %arg3[%c0_15, %c0_16] : memref<16x2xf32, #tpu.memory_space<vmem>>, vector<16x2xf32>
      %cst_17 = arith.constant dense<0.000000e+00> : vector<1x2xf32>
      %15 = tpu.matmul %13, %14, %cst_17 {dimension_numbers = #tpu.dot_dimension_numbers<[1], [0], [0], [1], [0, 0, 1, 1], [], []>} : vector<1x16xf32>, vector<16x2xf32>, vector<1x2xf32> -> vector<1x2xf32>
      %cst_18 = arith.constant 0.000000e+00 : f32
      %16 = vector.broadcast %cst_18 : f32 to vector<1x2xf32>
      %17 = arith.maximumf %15, %16 : vector<1x2xf32>
      %c0_19 = arith.constant 0 : index
      %c0_20 = arith.constant 0 : index
      %18 = vector.load %arg4[%c0_19, %c0_20] : memref<2x16xf32, #tpu.memory_space<vmem>>, vector<2x16xf32>
      %cst_21 = arith.constant dense<0.000000e+00> : vector<1x16xf32>
      %19 = tpu.matmul %17, %18, %cst_21 {dimension_numbers = #tpu.dot_dimension_numbers<[1], [0], [0], [1], [0, 0, 1, 1], [], []>} : vector<1x2xf32>, vector<2x16xf32>, vector<1x16xf32> -> vector<1x16xf32>
      %20 = arith.negf %19 : vector<1x16xf32>
      %21 = math.exp %20 : vector<1x16xf32>
      %cst_22 = arith.constant 1.000000e+00 : f32
      %22 = vector.broadcast %cst_22 : f32 to vector<1x16xf32>
      %23 = arith.addf %22, %21 : vector<1x16xf32>
      %24 = arith.divf %22, %23 : vector<1x16xf32>
      %c0_23 = arith.constant 0 : index
      %c0_24 = arith.constant 0 : index
      %25 = vector.load %arg5[%c0_23, %c0_24] : memref<8x16xf32, #tpu.memory_space<vmem>>, vector<1x16xf32>
      tpu.vector_store %arg5[%c0_23, %c0_24], %24 {strides = array<i32>} : memref<8x16xf32, #tpu.memory_space<vmem>>, vector<1x16xf32>,
    } else {
    }
    return
  }
  func.func @transform_0(%arg0: i32, %arg1: i32) -> (i32, i32, i32) {
    %c0_i32 = arith.constant 0 : i32
    %c0_i32_0 = arith.constant 0 : i32
    return %arg0, %c0_i32, %arg1 : i32, i32, i32
  }
  func.func @transform_1(%arg0: i32, %arg1: i32) -> (i32, i32) {
    %c0_i32 = arith.constant 0 : i32
    %c0_i32_0 = arith.constant 0 : i32
    %c0_i32_1 = arith.constant 0 : i32
    return %c0_i32, %c0_i32_0 : i32, i32
  }
  func.func @transform_2(%arg0: i32, %arg1: i32) -> (i32, i32) {
    %c0_i32 = arith.constant 0 : i32
    %c0_i32_0 = arith.constant 0 : i32
    %c0_i32_1 = arith.constant 0 : i32
    return %c0_i32, %c0_i32_0 : i32, i32
  }
  func.func @transform_3(%arg0: i32, %arg1: i32) -> (i32, i32) {
    %c0_i32 = arith.constant 0 : i32
    %c0_i32_0 = arith.constant 0 : i32
    return %arg0, %c0_i32 : i32, i32
  }
}

</mosaic_0001>

<llo_original>
// kernel: tpu_custom_call.1
$region0: #{tpu_custom_call.1}
  #allocation0 [shape = 'u32[]', space=smem, size = 0x4, offset = 0x4, fixed_abs, tag = 'smem constant byte address 0x4 - core index']
  #allocation1 [shape = 'u32[144,128]{1,0:T(1,128)}', space=vmem, size = 0x12000, scoped, tag = 'internal scratch']
  #allocation2 [shape = 'f32[1,16,256]{2,1,0:T(8,128)}', space=vmem, size = 0x4000, scoped, tag = 'scratch operand']
  %s0 = inlined_call_operand.hbm [shape: f32[2,16,256], index: 0, kind: input, shape index: {}]
  %s1 = inlined_call_operand.vmem [shape: f32[16,2], index: 1, kind: input, shape index: {}]
  %s2 = inlined_call_operand.vmem [shape: f32[2,16], index: 2, kind: input, shape index: {}]
  %s3 = inlined_call_operand.hbm [shape: f32[16,16], index: 3, kind: output, shape index: {}]
  %s4 = sld [smem:[#allocation0]]
  $region57: #{tpu_custom_call.1} parent=0
    _
  %s6 = ssub.s32 1, %s4
  %s7 = scalar_select 0, %s6, %s4
  $region1: #{tpu_custom_call.1} parent=0
    #allocation3 [shape = 'u8[32768]{0}', space=vmem, size = 0x8000, scoped, tag = 'input window, operand 0']
    #allocation4 [shape = 's32[2]{0}', space=sflag, size = 0x8, scoped, tag = 'scoped memory for tpu_custom_call.1']
    #allocation5 [shape = 's32[2]{0}', space=sflag, size = 0x8, scoped, tag = 'scoped memory for tpu_custom_call.1']
    #allocation6 [shape = 'u8[8192]{0}', space=vmem, size = 0x2000, scoped, tag = 'output window, operand 0']
    %8 = vsyncpa [#allocation4], 0
    %s9 = scalar_lea.sflag [#allocation4], 1
    %10 = vsyncpa %s9, 0
    %11 = vsyncpa [#allocation5], 0
    %s12 = scalar_lea.sflag [#allocation5], 1
    %13 = vsyncpa %s12, 0
    loop: start=0, step=1, limit=4
    $region2: #{tpu_custom_call.1} parent=1 // loop_pre_header
      _
    $region3: #{tpu_custom_call.1} parent=1 // loop_header
      %s15 = sphi 0, %s19
      %p16 = scmp.ge.s32.totalorder %s15, 4
      %s22 = sphi 0, %s34
      %s23 = sphi 0, %s30
      %s24 = sphi 0, %s22
      %s25 = sphi 0, %s23
      %s26 = sphi 0, %s24
      %s27 = sphi 0, %s25
      %s39 = sphi 0, %s41
      %s42 = sphi 0, %s39
      %s43 = sphi 0, %s42
      %s59 = sphi 0, %s43
      %s63 = sphi 0, %s63
      %s65 = sphi 0, %s63
      %s66 = sphi 0, %s65
      %s80 = sphi 0, %s66
      %s84 = sphi 0, %s84
      %s86 = sphi 0, %s84
      %s87 = sphi 0, %s86
      %s101 = sphi 0, %s87
      %s107 = sphi 0, %s109
      %s110 = sphi 0, %s107
      %s111 = sphi 0, %s110
      %s127 = sphi 0, %s111
    $region4: #{tpu_custom_call.1} parent=1 // loop_header_branch
      %18 = sbr.rel (%p16) target = $region8
    $region5: #{tpu_custom_call.1} parent=1 // loop_body
      %s20 = ssub.s32 %s15, 1
      %s21 = ssub.s32 %s15, 2
      %s28 = sadd.s32 1, %s23
      %p29 = scmp.ge.s32.totalorder %s28, 1
      %s30 = scalar_select %p29, 0, %s28
      %s31 = sadd.s32 1, %s22
      %s32 = scalar_select %p29, %s31, %s22
      %p33 = scmp.ge.s32.totalorder %s32, 2
      %s34 = scalar_select %p33, 0, %s32
      %s35 = ssub.s32 %s22, %s34
      %s36 = ssub.s32 %s23, %s30
      %s37 = sor.u32 %s35, %s36
      %p38 = scmp.eq.s32.totalorder %s37, 0
      %s40 = sadd.s32 %s39, 1
      %s41 = scalar_select %p38, %s39, %s40
      %p44 = pneg %p38
      %p45 = scmp.eq.s32.totalorder %s15, 1
      %p46 = por %p44, %p45
      %p47 = scmp.ne.s32.totalorder %s39, %s42
      %p48 = scmp.eq.s32.totalorder %s15, 0
      %p49 = por %p47, %p48
      %p50 = scmp.ne.s32.totalorder %s39, %s42
      %p51 = scmp.eq.s32.totalorder %s20, 1
      %p52 = por %p50, %p51
      %p53 = scmp.ne.s32.totalorder %s42, %s43
      %p54 = scmp.eq.s32.totalorder %s20, 0
      %p55 = por %p53, %p54
      %p56 = scmp.ne.s32.totalorder %s42, %s43
      %p57 = scmp.eq.s32.totalorder %s21, 1
      %p58 = por %p56, %p57
      %p60 = scmp.ne.s32.totalorder %s43, %s59
      %p61 = scmp.eq.s32.totalorder %s21, 0
      %p62 = por %p60, %p61
      %s64 = sadd.s32 %s63, 1
      %p67 = scmp.eq.s32.totalorder %s15, 1
      %p68 = scmp.ne.s32.totalorder %s63, %s65
      %p69 = scmp.eq.s32.totalorder %s15, 0
      %p70 = por %p68, %p69
      %p71 = scmp.ne.s32.totalorder %s63, %s65
      %p72 = scmp.eq.s32.totalorder %s20, 1
      %p73 = por %p71, %p72
      %p74 = scmp.ne.s32.totalorder %s65, %s66
      %p75 = scmp.eq.s32.totalorder %s20, 0
      %p76 = por %p74, %p75
      %p77 = scmp.ne.s32.totalorder %s65, %s66
      %p78 = scmp.eq.s32.totalorder %s21, 1
      %p79 = por %p77, %p78
      %p81 = scmp.ne.s32.totalorder %s66, %s80
      %p82 = scmp.eq.s32.totalorder %s21, 0
      %p83 = por %p81, %p82
      %s85 = sadd.s32 %s84, 1
      %p88 = scmp.eq.s32.totalorder %s15, 1
      %p89 = scmp.ne.s32.totalorder %s84, %s86
      %p90 = scmp.eq.s32.totalorder %s15, 0
      %p91 = por %p89, %p90
      %p92 = scmp.ne.s32.totalorder %s84, %s86
      %p93 = scmp.eq.s32.totalorder %s20, 1
      %p94 = por %p92, %p93
      %p95 = scmp.ne.s32.totalorder %s86, %s87
      %p96 = scmp.eq.s32.totalorder %s20, 0
      %p97 = por %p95, %p96
      %p98 = scmp.ne.s32.totalorder %s86, %s87
      %p99 = scmp.eq.s32.totalorder %s21, 1
      %p100 = por %p98, %p99
      %p102 = scmp.ne.s32.totalorder %s87, %s101
      %p103 = scmp.eq.s32.totalorder %s21, 0
      %p104 = por %p102, %p103
      %s105 = ssub.s32 %s22, %s34
      %p106 = scmp.eq.s32.totalorder %s105, 0
      %s108 = sadd.s32 %s107, 1
      %s109 = scalar_select %p106, %s107, %s108
      %p112 = pneg %p106
      %p113 = scmp.eq.s32.totalorder %s15, 1
      %p114 = por %p112, %p113
      %p115 = scmp.ne.s32.totalorder %s107, %s110
      %p116 = scmp.eq.s32.totalorder %s15, 0
      %p117 = por %p115, %p116
      %p118 = scmp.ne.s32.totalorder %s107, %s110
      %p119 = scmp.eq.s32.totalorder %s20, 1
      %p120 = por %p118, %p119
      %p121 = scmp.ne.s32.totalorder %s110, %s111
      %p122 = scmp.eq.s32.totalorder %s20, 0
      %p123 = por %p121, %p122
      %p124 = scmp.ne.s32.totalorder %s110, %s111
      %p125 = scmp.eq.s32.totalorder %s21, 1
      %p126 = por %p124, %p125
      %p128 = scmp.ne.s32.totalorder %s111, %s127
      %p129 = scmp.eq.s32.totalorder %s21, 0
      %p130 = por %p128, %p129
      %p131 = scmp.le.s32.totalorder 1, %s15
      %p132 = scmp.lt.s32.totalorder %s15, 3
      %p133 = pnand %p131, %p132
      %p134 = pneg %p133
      // Predicated region
      $region9: #{tpu_custom_call.1} parent=5 // pred_check
        _
      $region10: #{tpu_custom_call.1} parent=5 // pred_check_branch
        %136 = sbr.rel (%p133) target = $region12
      $region11: #{tpu_custom_call.1} parent=5 // pred_region
        %s137 = ssub.s32 %s15, 1
        // Predicated region
        $region13: #{tpu_custom_call.1} parent=11 // pred_check
          %p138 = pneg %p76
        $region14: #{tpu_custom_call.1} parent=11 // pred_check_branch
          %140 = sbr.rel (%p138) target = $region16
        $region15: #{tpu_custom_call.1} parent=11 // pred_region
          _
        $region16: #{tpu_custom_call.1} parent=11 // pred_fallthru
          _
        // Predicated region
        $region17: #{tpu_custom_call.1} parent=11 // pred_check
          %p141 = pneg %p97
        $region18: #{tpu_custom_call.1} parent=11 // pred_check_branch
          %143 = sbr.rel (%p141) target = $region20
        $region19: #{tpu_custom_call.1} parent=11 // pred_region
          _
        $region20: #{tpu_custom_call.1} parent=11 // pred_fallthru
          _
      $region12: #{tpu_custom_call.1} parent=5 // pred_fallthru
        _
      %p144 = scmp.lt.s32.totalorder %s15, 2
      // Predicated region
      $region21: #{tpu_custom_call.1} parent=5 // pred_check
        %p145 = pneg %p144
      $region22: #{tpu_custom_call.1} parent=5 // pred_check_branch
        %147 = sbr.rel (%p145) target = $region24
      $region23: #{tpu_custom_call.1} parent=5 // pred_region
        // Predicated region
        $region25: #{tpu_custom_call.1} parent=23 // pred_check
          %p148 = pneg %p49
        $region26: #{tpu_custom_call.1} parent=23 // pred_check_branch
          %150 = sbr.rel (%p148) target = $region28
        $region27: #{tpu_custom_call.1} parent=23 // pred_region
          %s151 = sand.u32 %s39, 1
          %s152 = scalar_lea.sflag [#allocation4], %s151
          %s153 = sand.u32 %s39, 1
          %s154 = smul.addr %s153, 32
          %s155 = scalar_lea.vmem [#allocation3], %s154
          %s156 = smul.u32 2, %s23
          %s158 = ssub.s32 512, 512
          %159 = vsyncadd %s152, %s158
          %s160 = smul.addr %s22, 4
          %s161 = sadd.s32 %s156, %s160
          %s162 = smul.addr %s161, 128
          %s163 = scalar_lea.hbm %s0, %s162
          %s164 = sshll.u32 %s155, 4
          %s165 = int_to_ptr.vmem [resolvable:$true] %s164
          %170 = dma.hbm_to_vmem [thread:$0]  %s163, 512, %s165, %s152, 256, 256, 16
        $region28: #{tpu_custom_call.1} parent=23 // pred_fallthru
          _
      $region24: #{tpu_custom_call.1} parent=5 // pred_fallthru
        _
      %p171 = scmp.le.s32.totalorder 1, %s15
      %p172 = scmp.lt.s32.totalorder %s15, 3
      %p173 = pnand %p171, %p172
      %p174 = pneg %p173
      // Predicated region
      $region29: #{tpu_custom_call.1} parent=5 // pred_check
        _
      $region30: #{tpu_custom_call.1} parent=5 // pred_check_branch
        %176 = sbr.rel (%p173) target = $region32
      $region31: #{tpu_custom_call.1} parent=5 // pred_region
        %s177 = ssub.s32 %s15, 1
        %s178 = sand.u32 %s42, 1
        %s179 = scalar_lea.sflag [#allocation4], %s178
        %s180 = sand.u32 %s42, 1
        %s181 = smul.addr %s180, 32
        %s182 = scalar_lea.vmem [#allocation3], %s181
        // Predicated region
        $region33: #{tpu_custom_call.1} parent=31 // pred_check
          %p183 = pneg %p55
        $region34: #{tpu_custom_call.1} parent=31 // pred_check_branch
          %185 = sbr.rel (%p183) target = $region36
        $region35: #{tpu_custom_call.1} parent=31 // pred_region
          %186 = dma.done %s179, 512
        $region36: #{tpu_custom_call.1} parent=31 // pred_fallthru
          _
        %s187 = sand.u32 %s42, 1
        %s188 = scalar_lea.sflag [#allocation4], %s187
        %s189 = sand.u32 %s42, 1
        %s190 = smul.addr %s189, 32
        %s191 = scalar_lea.vmem [#allocation3], %s190
        %p192 = pneg %p55
        %p193 = pneg %p52
        %p194 = pneg %p76
        %p195 = pneg %p73
        %p196 = pneg %p97
        %p197 = pneg %p94
        %p198 = pneg %p123
        %p199 = pneg %p120
        %s200 = sand.u32 %s110, 1
        %s201 = scalar_lea.sflag [#allocation5], %s200
        %s202 = sand.u32 %s110, 1
        %s203 = smul.addr %s202, 8
        %s204 = scalar_lea.vmem [#allocation6], %s203
        %s205 = smul.u32 2, %s25
        %p206 = scmp.eq.s32.totalorder %s25, 0
        // Predicated region
        $region37: #{tpu_custom_call.1} parent=31 // pred_check
          %p207 = pneg %p206
        $region38: #{tpu_custom_call.1} parent=31 // pred_check_branch
          %209 = sbr.rel (%p207) target = $region40
        $region39: #{tpu_custom_call.1} parent=31 // pred_region
          %210 = vst [vmem:[#allocation2] sm:$0xff] 0.0
          %211 = vst [vmem:[#allocation2 + $0x8] sm:$0xff] 0.0
          %212 = vst [vmem:[#allocation2 + $0x10] sm:$0xff] 0.0
          %213 = vst [vmem:[#allocation2 + $0x18] sm:$0xff] 0.0
        $region40: #{tpu_custom_call.1} parent=31 // pred_fallthru
          _
        %v214 = vld [vmem:[#allocation2] sm:$0xff]
        %v215 = vld [vmem:[#allocation2 + $0x8] sm:$0xff]
        %v216 = vld [vmem:[#allocation2 + $0x10] sm:$0xff]
        %v217 = vld [vmem:[#allocation2 + $0x18] sm:$0xff]
        %v218 = vld [vmem:[%s182] sm:$0xff]
        %v219 = vld [vmem:[%s182 + $0x8] sm:$0xff]
        %v220 = vld [vmem:[%s182 + $0x10] sm:$0xff]
        %v221 = vld [vmem:[%s182 + $0x18] sm:$0xff]
        %v222 = vadd.f32 %v214, %v218
        %v223 = vadd.f32 %v215, %v219
        %v224 = vadd.f32 %v216, %v220
        %v225 = vadd.f32 %v217, %v221
        %226 = vst [vmem:[#allocation2] sm:$0xff] %v222
        %227 = vst [vmem:[#allocation2 + $0x8] sm:$0xff] %v223
        %228 = vst [vmem:[#allocation2 + $0x10] sm:$0xff] %v224
        %229 = vst [vmem:[#allocation2 + $0x18] sm:$0xff] %v225
        // Predicated region
        $region41: #{tpu_custom_call.1} parent=31 // pred_check
          %p230 = pneg %p206
        $region42: #{tpu_custom_call.1} parent=31 // pred_check_branch
          %232 = sbr.rel (%p230) target = $region44
        $region43: #{tpu_custom_call.1} parent=31 // pred_region
          %v233 = vld [vmem:[#allocation2] sm:$0xff]
          %v234 = vld [vmem:[#allocation2 + $0x8] sm:$0xff]
          %v235 = vld [vmem:[#allocation2 + $0x10] sm:$0xff]
          %v236 = vld [vmem:[#allocation2 + $0x18] sm:$0xff]
          %v237 = vadd.f32 %v233, %v234
          %238 = vadd.xlane.f32.xlu0 %v237
          %v239 = vpop.xlane.xlu0 %238
          %v240 = vadd.f32 %v235, %v236
          %241 = vadd.xlane.f32.xlu0 %v240
          %v242 = vpop.xlane.xlu0 %241
          %v243 = vmul.f32 %v239, 0.00390625
          %v244 = vmul.f32 %v242, 0.00390625
          %v245 = vld [vmem:[%s1] sm:$0xff]
          %v246 = vld [vmem:[%s1 + $0x8] sm:$0xff]
          %v249 = vlaneseq
          %v250 = vand.u32 %v249, 127
          %v251 = vlaneseq
          %v252 = vshrl.u32 %v251, 7
          %v253 = vsub.s32 %v250, %v252
          %v254 = vrot.slane %v243, %v253
          %v255 = vadd.s32 %v250, 4294967288
          %v256 = vlaneseq
          %v257 = vshrl.u32 %v256, 7
          %v258 = vsub.s32 %v255, %v257
          %v259 = vrot.slane %v244, %v258
          %vm260 = vcmask 130112
          %v261 = vsel %vm260, %v259, %v254
          %vm262 = vcmask 130048
          %v263 = vsel %vm262, %v261, 0
          %265 = vmatprep.subr.mxu0 0.0
          %266 = vmatpush1.msra.mxu0 %v245
          %267 = vmatprep.subr.mxu0 0.0
          %268 = vmatpush1.msra.mxu0 %v246
          %269 = vmatprep.subr.mxu0 0.0
          %270 = vmatpush1.msra.mxu0 0.0
          %271 = vmatprep.subr.mxu0 0.0
          %272 = vmatpush1.msra.mxu0 0.0
          %273 = vmatprep.subr.mxu0 0.0
          %274 = vmatpush1.msra.mxu0 0.0
          %275 = vmatprep.subr.mxu0 0.0
          %276 = vmatpush1.msra.mxu0 0.0
          %277 = vmatprep.subr.mxu0 0.0
          %278 = vmatpush1.msra.mxu0 0.0
          %279 = vmatprep.subr.mxu0 0.0
          %280 = vmatpush1.msra.mxu0 0.0
          %281 = vmatprep.subr.mxu0 0.0
          %282 = vmatpush1.msra.mxu0 0.0
          %283 = vmatprep.subr.mxu0 0.0
          %284 = vmatpush1.msra.mxu0 0.0
          %285 = vmatprep.subr.mxu0 0.0
          %286 = vmatpush1.msra.mxu0 0.0
          %287 = vmatprep.subr.mxu0 0.0
          %288 = vmatpush1.msra.mxu0 0.0
          %289 = vmatprep.subr.mxu0 0.0
          %290 = vmatpush1.msra.mxu0 0.0
          %291 = vmatprep.subr.mxu0 0.0
          %292 = vmatpush1.msra.mxu0 0.0
          %293 = vmatprep.subr.mxu0 0.0
          %294 = vmatpush1.msra.mxu0 0.0
          %295 = vmatprep.subr.mxu0 0.0
          %296 = vmatpush1.msra.mxu0 0.0
          %297 = vmatprep.subr.mxu0 0.0
          %298 = vmatpush1.msra.mxu0 0.0
          %299 = vmatprep.subr.mxu0 0.0
          %300 = vmatpush1.msra.mxu0 0.0
          %301 = vmatprep.subr.mxu0 0.0
          %302 = vmatpush1.msra.mxu0 0.0
          %303 = vmatprep.subr.mxu0 0.0
          %304 = vmatpush1.msra.mxu0 0.0
          %305 = vmatprep.subr.mxu0 0.0
          %306 = vmatpush1.msra.mxu0 0.0
          %307 = vmatprep.subr.mxu0 0.0
          %308 = vmatpush1.msra.mxu0 0.0
          %309 = vmatprep.subr.mxu0 0.0
          %310 = vmatpush1.msra.mxu0 0.0
          %311 = vmatprep.subr.mxu0 0.0
          %312 = vmatpush1.msra.mxu0 0.0
          %313 = vmatprep.subr.mxu0 0.0
          %314 = vmatpush1.msra.mxu0 0.0
          %315 = vmatprep.subr.mxu0 0.0
          %316 = vmatpush1.msra.mxu0 0.0
          %317 = vmatprep.subr.mxu0 0.0
          %318 = vmatpush1.msra.mxu0 0.0
          %319 = vmatprep.subr.mxu0 0.0
          %320 = vmatpush1.msra.mxu0 0.0
          %321 = vmatprep.subr.mxu0 0.0
          %322 = vmatpush1.msra.mxu0 0.0
          %323 = vmatprep.subr.mxu0 0.0
          %324 = vmatpush1.msra.mxu0 0.0
          %325 = vmatprep.subr.mxu0 0.0
          %326 = vmatpush1.msra.mxu0 0.0
          %327 = vmatprep.subr.mxu0 0.0
          %328 = vmatpush1.msra.mxu0 0.0
          %329 = vmatprep.mubr.f32.mxu0 0.0
          %330 = vmatmul.mubr.f32.gmra.mrb[0].mxu0 %v263
          %v331 = vpop.f32.mrb[0].mxu0
          %v332 = vadd.f32 0.0, %v331
          %v333 = vpop.f32.mrb[0].mxu0
          %334 = vdwg.mxu0
          %v335 = vmax.f32 %v332, 0.0
          %v336 = vld [vmem:[%s2] sm:$0x3]
          %vm337 = vcmask 15360
          %v339 = vsel %vm337, %v335, 0
          %vm341 = vcmask 1041408
          %v343 = vsel %vm341, %v336, 0
          %345 = vmatprep.subr.mxu0 0.0
          %346 = vmatpush1.msra.mxu0 %v343
          %347 = vmatprep.subr.mxu0 0.0
          %348 = vmatpush1.msra.mxu0 0.0
          %349 = vmatprep.subr.mxu0 0.0
          %350 = vmatpush1.msra.mxu0 0.0
          %351 = vmatprep.subr.mxu0 0.0
          %352 = vmatpush1.msra.mxu0 0.0
          %353 = vmatprep.subr.mxu0 0.0
          %354 = vmatpush1.msra.mxu0 0.0
          %355 = vmatprep.subr.mxu0 0.0
          %356 = vmatpush1.msra.mxu0 0.0
          %357 = vmatprep.subr.mxu0 0.0
          %358 = vmatpush1.msra.mxu0 0.0
          %359 = vmatprep.subr.mxu0 0.0
          %360 = vmatpush1.msra.mxu0 0.0
          %361 = vmatprep.subr.mxu0 0.0
          %362 = vmatpush1.msra.mxu0 0.0
          %363 = vmatprep.subr.mxu0 0.0
          %364 = vmatpush1.msra.mxu0 0.0
          %365 = vmatprep.subr.mxu0 0.0
          %366 = vmatpush1.msra.mxu0 0.0
          %367 = vmatprep.subr.mxu0 0.0
          %368 = vmatpush1.msra.mxu0 0.0
          %369 = vmatprep.subr.mxu0 0.0
          %370 = vmatpush1.msra.mxu0 0.0
          %371 = vmatprep.subr.mxu0 0.0
          %372 = vmatpush1.msra.mxu0 0.0
          %373 = vmatprep.subr.mxu0 0.0
          %374 = vmatpush1.msra.mxu0 0.0
          %375 = vmatprep.subr.mxu0 0.0
          %376 = vmatpush1.msra.mxu0 0.0
          %377 = vmatprep.subr.mxu0 0.0
          %378 = vmatpush1.msra.mxu0 0.0
          %379 = vmatprep.subr.mxu0 0.0
          %380 = vmatpush1.msra.mxu0 0.0
          %381 = vmatprep.subr.mxu0 0.0
          %382 = vmatpush1.msra.mxu0 0.0
          %383 = vmatprep.subr.mxu0 0.0
          %384 = vmatpush1.msra.mxu0 0.0
          %385 = vmatprep.subr.mxu0 0.0
          %386 = vmatpush1.msra.mxu0 0.0
          %387 = vmatprep.subr.mxu0 0.0
          %388 = vmatpush1.msra.mxu0 0.0
          %389 = vmatprep.subr.mxu0 0.0
          %390 = vmatpush1.msra.mxu0 0.0
          %391 = vmatprep.subr.mxu0 0.0
          %392 = vmatpush1.msra.mxu0 0.0
          %393 = vmatprep.subr.mxu0 0.0
          %394 = vmatpush1.msra.mxu0 0.0
          %395 = vmatprep.subr.mxu0 0.0
          %396 = vmatpush1.msra.mxu0 0.0
          %397 = vmatprep.subr.mxu0 0.0
          %398 = vmatpush1.msra.mxu0 0.0
          %399 = vmatprep.subr.mxu0 0.0
          %400 = vmatpush1.msra.mxu0 0.0
          %401 = vmatprep.subr.mxu0 0.0
          %402 = vmatpush1.msra.mxu0 0.0
          %403 = vmatprep.subr.mxu0 0.0
          %404 = vmatpush1.msra.mxu0 0.0
          %405 = vmatprep.subr.mxu0 0.0
          %406 = vmatpush1.msra.mxu0 0.0
          %407 = vmatprep.subr.mxu0 0.0
          %408 = vmatpush1.msra.mxu0 0.0
          %409 = vmatprep.mubr.f32.mxu0 0.0
          %410 = vmatmul.mubr.f32.gmra.mrb[0].mxu0 %v339
          %v411 = vpop.f32.mrb[0].mxu0
          %v412 = vadd.f32 0.0, %v411
          %v413 = vpop.f32.mrb[0].mxu0
          %414 = vdwg.mxu0
          %v415 = vxor.u32 %v412, 2147483648
          %v416 = vmul.f32 %v415, 1.442695
          %v417 = vpow.pop %v416
          %v418 = vadd.f32 %v417, 1.0
          %v419 = vrcp.pop %v418
          %v420 = vmul.f32 1.0, %v419
          %vm421 = vcmask 122880
          %422 = vst.msk [vmem:[%s204] sm:$0x1] %vm421, %v420
        $region44: #{tpu_custom_call.1} parent=31 // pred_fallthru
          _
        %s423 = sand.u32 %s110, 1
        %s424 = scalar_lea.sflag [#allocation5], %s423
        %s425 = sand.u32 %s110, 1
        %s426 = smul.addr %s425, 8
        %s427 = scalar_lea.vmem [#allocation6], %s426
        // Predicated region
        $region45: #{tpu_custom_call.1} parent=31 // pred_check
          %p428 = pneg %p120
        $region46: #{tpu_custom_call.1} parent=31 // pred_check_branch
          %430 = sbr.rel (%p428) target = $region48
        $region47: #{tpu_custom_call.1} parent=31 // pred_region
          %s432 = ssub.s32 128, 128
          %433 = vsyncadd %s424, %s432
          %s434 = smul.addr %s24, 128
          %s435 = scalar_lea.hbm %s3, %s434
          %s437 = sshll.u32 %s427, 4
          %s438 = int_to_ptr.vmem [resolvable:$true] %s437
          %440 = dma.vmem_to_hbm [thread:$0]  %s438, 128, %s435, %s424
        $region48: #{tpu_custom_call.1} parent=31 // pred_fallthru
          _
      $region32: #{tpu_custom_call.1} parent=5 // pred_fallthru
        _
      %p441 = scmp.le.s32.totalorder 2, %s15
      // Predicated region
      $region49: #{tpu_custom_call.1} parent=5 // pred_check
        %p442 = pneg %p441
      $region50: #{tpu_custom_call.1} parent=5 // pred_check_branch
        %444 = sbr.rel (%p442) target = $region52
      $region51: #{tpu_custom_call.1} parent=5 // pred_region
        %s445 = ssub.s32 %s15, 2
        // Predicated region
        $region53: #{tpu_custom_call.1} parent=51 // pred_check
          %p446 = pneg %p126
        $region54: #{tpu_custom_call.1} parent=51 // pred_check_branch
          %448 = sbr.rel (%p446) target = $region56
        $region55: #{tpu_custom_call.1} parent=51 // pred_region
          %s449 = sand.u32 %s111, 1
          %s450 = scalar_lea.sflag [#allocation5], %s449
          %s451 = sand.u32 %s111, 1
          %s452 = smul.addr %s451, 8
          %s453 = scalar_lea.vmem [#allocation6], %s452
          %454 = dma.done %s450, 128
        $region56: #{tpu_custom_call.1} parent=51 // pred_fallthru
          _
      $region52: #{tpu_custom_call.1} parent=5 // pred_fallthru
        _
    $region6: #{tpu_custom_call.1} parent=1 // loop_footer
      %s19 = sadd.s32 1, %s15
    $region7: #{tpu_custom_call.1} parent=1 // loop_footer_branch
      %14 = sbr.rel target = $region3
    $region8: #{tpu_custom_call.1} parent=1 // loop_exit
      _
    %455 = vsyncpa [#allocation4], 1
    %s456 = scalar_lea.sflag [#allocation4], 1
    %457 = vsyncpa %s456, 1
    %458 = vsyncpa [#allocation5], 1
    %s459 = scalar_lea.sflag [#allocation5], 1
    %460 = vsyncpa %s459, 1

</llo_original>
